<compile_context>
chip_gen: v6e
topology: v6e:2x2x1
jax: 0.10.0
libtpu: 0.0.40
codegen_flags: <defaults>
</compile_context>

<pallas_src>
import jax
import jax.numpy as jnp
from jax.experimental import pallas as pl
from jax.experimental.pallas import tpu as pltpu


def channel_attention_kernel(x_ref, w1_ref, b1_ref, w2_ref, b2_ref, o_ref):
    x = x_ref[...]                                             # (tm, C)
    # Squeeze: Linear(C -> C//r) + ReLU   (MXU + VPU, f32 accumulation)
    h = jnp.dot(x, w1_ref[...], preferred_element_type=jnp.float32) + b1_ref[...]
    h = jnp.maximum(h, 0.0)
    # Excite: Linear(C//r -> C) + Sigmoid (MXU + EUP, f32)
    y = jnp.dot(h, w2_ref[...], preferred_element_type=jnp.float32) + b2_ref[...]
    y = 1.0 / (1.0 + jnp.exp(-y))                              # exact sigmoid, f32
    # Gate the input (f32 math, cast once on store).
    o_ref[...] = (x.astype(jnp.float32) * y).astype(o_ref.dtype)


def _round_up(n, m):
    return ((n + m - 1) // m) * m


def _pick_row_tile(M):
    """Row-tile selection per the perf review:
      * target large tiles (2048 rows) to amortize the ~0.35 us/step overhead,
      * but guarantee >=4 grid steps once M is past ~128 so the 'parallel' axis
        can shard across both v7x TensorCores,
      * multiple of 16 so the same tiling is valid for f32 and bf16 inputs.
    """
    if M <= 128:
        return M                       # single full-extent tile (always legal)
    return max(16, min(2048, _round_up(pl.cdiv(M, 4), 16)))


def channel_attention(x, w1, b1, w2, b2, *, tm=None):
    """x: (..., C); w1: (C, C//r); b1: (C//r,); w2: (C//r, C); b2: (C,)."""
    orig_shape = x.shape
    C = orig_shape[-1]
    H = w1.shape[1]
    x2 = x.reshape(-1, C)
    M = x2.shape[0]

    if tm is None:
        tm = _pick_row_tile(M)

    b1r = b1.reshape(1, H)
    b2r = b2.reshape(1, C)

    grid = (pl.cdiv(M, tm),)

    bytes_accessed = (
        x2.size * x2.dtype.itemsize            # read x
        + x2.size * x2.dtype.itemsize          # write out
        + w1.size * w1.dtype.itemsize
        + w2.size * w2.dtype.itemsize
        + b1.size * b1.dtype.itemsize
        + b2.size * b2.dtype.itemsize
    )
    cost = pl.CostEstimate(
        flops=4 * M * C * H + 4 * M * C,       # two matmuls + bias/relu/gate
        transcendentals=M * C,                 # exp in sigmoid
        bytes_accessed=bytes_accessed,
    )

    out = pl.pallas_call(
        channel_attention_kernel,
        out_shape=jax.ShapeDtypeStruct((M, C), x.dtype),
        grid_spec=pltpu.PrefetchScalarGridSpec(
            num_scalar_prefetch=0,
            grid=grid,
            in_specs=[
                pl.BlockSpec((tm, C), lambda i: (i, 0)),   # x row-tile
                pl.BlockSpec((C, H), lambda i: (0, 0)),    # W1 (grid-invariant)
                pl.BlockSpec((1, H), lambda i: (0, 0)),    # b1
                pl.BlockSpec((H, C), lambda i: (0, 0)),    # W2 (grid-invariant)
                pl.BlockSpec((1, C), lambda i: (0, 0)),    # b2
            ],
            out_specs=pl.BlockSpec((tm, C), lambda i: (i, 0)),
        ),
        compiler_params=pltpu.CompilerParams(
            dimension_semantics=("parallel",)),
        cost_estimate=cost,
    )(x2, w1, b1r, w2, b2r)

    return out.reshape(orig_shape)


def init_params(key, channel, reduction=8):
    """Mirror nn.Linear default init U(-1/sqrt(fan_in), 1/sqrt(fan_in)).
    Weights stored transposed as (in_features, out_features)."""
    hidden = channel // reduction
    k1, k2, k3, k4 = jax.random.split(key, 4)
    bound1 = 1.0 / jnp.sqrt(jnp.float32(channel))
    bound2 = 1.0 / jnp.sqrt(jnp.float32(hidden))
    w1 = jax.random.uniform(k1, (channel, hidden), jnp.float32, -bound1, bound1)
    b1 = jax.random.uniform(k2, (hidden,), jnp.float32, -bound1, bound1)
    w2 = jax.random.uniform(k3, (hidden, channel), jnp.float32, -bound2, bound2)
    b2 = jax.random.uniform(k4, (channel,), jnp.float32, -bound2, bound2)
    return w1, b1, w2, b2


def reference(x, w1, b1, w2, b2):
    h = jnp.maximum(x @ w1 + b1, 0.0)
    y = 1.0 / (1.0 + jnp.exp(-(h @ w2 + b2)))
    return x * y


if __name__ == "__main__":
    # Small shapes consistent with the module; channel=128 keeps the output
    # lane-dense, reduction=8 -> hidden=16.
    batch, seq, channel, reduction = 2, 8, 128, 8

    key = jax.random.PRNGKey(0)
    kx, kp, kx2 = jax.random.split(key, 3)
    w1, b1, w2, b2 = init_params(kp, channel, reduction)

    # --- Test 1: f32, tiny shape (single-tile path), exact match to reference.
    x = jax.random.uniform(kx, (batch, seq, channel), jnp.float32, -1.0, 1.0)
    out = jax.block_until_ready(channel_attention(x, w1, b1, w2, b2))
    ref = reference(x, w1, b1, w2, b2)
    assert out.shape == x.shape
    assert jnp.allclose(out, ref, atol=1e-5, rtol=1e-5), "f32 mismatch vs reference"

    # --- Test 2: f32, larger M so the multi-step tiled/parallel path is exercised
    # (M=640 -> tm=160 -> 4 grid steps).
    x_big = jax.random.uniform(kx2, (4, 160, channel), jnp.float32, -1.0, 1.0)
    out_big = jax.block_until_ready(channel_attention(x_big, w1, b1, w2, b2))
    ref_big = reference(x_big, w1, b1, w2, b2)
    assert jnp.allclose(out_big, ref_big, atol=1e-5, rtol=1e-5), "tiled f32 mismatch"

    # --- Test 3: bf16 I/O (the big HBM-bandwidth lever); compute stays f32 inside
    # the kernel, so only bf16 input/output quantization error remains.
    x_bf = x_big.astype(jnp.bfloat16)
    w1_bf, b1_bf = w1.astype(jnp.bfloat16), b1.astype(jnp.bfloat16)
    w2_bf, b2_bf = w2.astype(jnp.bfloat16), b2.astype(jnp.bfloat16)
    out_bf = jax.block_until_ready(
        channel_attention(x_bf, w1_bf, b1_bf, w2_bf, b2_bf))
    ref_bf = reference(x_bf.astype(jnp.float32), w1_bf.astype(jnp.float32),
                       b1_bf.astype(jnp.float32), w2_bf.astype(jnp.float32),
                       b2_bf.astype(jnp.float32))
    assert out_bf.dtype == jnp.bfloat16
    assert jnp.allclose(out_bf.astype(jnp.float32), ref_bf, atol=3e-2), "bf16 mismatch"

    print("KERNEL_OK")
</pallas_src>

<mosaic_0001>
module attributes {stable_mosaic.version = 11 : i64} {
  func.func @channel_attention_kernel(%arg0: i32, %arg1: memref<16x128xf32, #tpu.memory_space<vmem>>, %arg2: memref<128x16xf32, #tpu.memory_space<vmem>>, %arg3: memref<1x16xf32, #tpu.memory_space<vmem>>, %arg4: memref<16x128xf32, #tpu.memory_space<vmem>>, %arg5: memref<1x128xf32, #tpu.memory_space<vmem>>, %arg6: memref<16x128xf32, #tpu.memory_space<vmem>>) attributes {dimension_semantics = [#tpu.dimension_semantics<parallel>], iteration_bounds = array<i64: 1>, scalar_prefetch = 0 : i64, scratch_operands = 0 : i64, tpu.core_type = #tpu.core_type<tc>, window_params = [{transform_indices = @transform_0, window_bounds = array<i64: 16, 128>}, {pipeline_mode = #tpu.pipeline_mode<synchronous>, transform_indices = @transform_1, window_bounds = array<i64: 128, 16>}, {pipeline_mode = #tpu.pipeline_mode<synchronous>, transform_indices = @transform_2, window_bounds = array<i64: 1, 16>}, {pipeline_mode = #tpu.pipeline_mode<synchronous>, transform_indices = @transform_3, window_bounds = array<i64: 16, 128>}, {pipeline_mode = #tpu.pipeline_mode<synchronous>, transform_indices = @transform_4, window_bounds = array<i64: 1, 128>}, {transform_indices = @transform_5, window_bounds = array<i64: 16, 128>}]} {
    %c0 = arith.constant 0 : index
    %c0_0 = arith.constant 0 : index
    %0 = vector.load %arg1[%c0, %c0_0] : memref<16x128xf32, #tpu.memory_space<vmem>>, vector<16x128xf32>
    %c0_1 = arith.constant 0 : index
    %c0_2 = arith.constant 0 : index
    %1 = vector.load %arg2[%c0_1, %c0_2] : memref<128x16xf32, #tpu.memory_space<vmem>>, vector<128x16xf32>
    %cst = arith.constant dense<0.000000e+00> : vector<16x16xf32>
    %2 = tpu.matmul %0, %1, %cst {dimension_numbers = #tpu.dot_dimension_numbers<[1], [0], [0], [1], [0, 0, 1, 1], [], []>} : vector<16x128xf32>, vector<128x16xf32>, vector<16x16xf32> -> vector<16x16xf32>
    %c0_3 = arith.constant 0 : index
    %c0_4 = arith.constant 0 : index
    %3 = vector.load %arg3[%c0_3, %c0_4] : memref<1x16xf32, #tpu.memory_space<vmem>>, vector<1x16xf32>
    %4 = vector.broadcast %3 : vector<1x16xf32> to vector<16x16xf32>
    %5 = arith.addf %2, %4 : vector<16x16xf32>
    %cst_5 = arith.constant 0.000000e+00 : f32
    %6 = vector.broadcast %cst_5 : f32 to vector<16x16xf32>
    %7 = arith.maximumf %5, %6 : vector<16x16xf32>
    %c0_6 = arith.constant 0 : index
    %c0_7 = arith.constant 0 : index
    %8 = vector.load %arg4[%c0_6, %c0_7] : memref<16x128xf32, #tpu.memory_space<vmem>>, vector<16x128xf32>
    %cst_8 = arith.constant dense<0.000000e+00> : vector<16x128xf32>
    %9 = tpu.matmul %7, %8, %cst_8 {dimension_numbers = #tpu.dot_dimension_numbers<[1], [0], [0], [1], [0, 0, 1, 1], [], []>} : vector<16x16xf32>, vector<16x128xf32>, vector<16x128xf32> -> vector<16x128xf32>
    %c0_9 = arith.constant 0 : index
    %c0_10 = arith.constant 0 : index
    %10 = vector.load %arg5[%c0_9, %c0_10] : memref<1x128xf32, #tpu.memory_space<vmem>>, vector<1x128xf32>
    %11 = vector.broadcast %10 : vector<1x128xf32> to vector<16x128xf32>
    %12 = arith.addf %9, %11 : vector<16x128xf32>
    %cst_11 = arith.constant 0.000000e+00 : f32
    %13 = vector.broadcast %cst_11 : f32 to vector<16x128xf32>
    %14 = arith.subf %13, %12 : vector<16x128xf32>
    %15 = math.exp %14 : vector<16x128xf32>
    %cst_12 = arith.constant 1.000000e+00 : f32
    %16 = vector.broadcast %cst_12 : f32 to vector<16x128xf32>
    %17 = arith.addf %16, %15 : vector<16x128xf32>
    %cst_13 = arith.constant 1.000000e+00 : f32
    %18 = vector.broadcast %cst_13 : f32 to vector<16x128xf32>
    %19 = arith.divf %18, %17 : vector<16x128xf32>
    %20 = arith.mulf %0, %19 : vector<16x128xf32>
    %c0_14 = arith.constant 0 : index
    %c0_15 = arith.constant 0 : index
    %21 = vector.load %arg6[%c0_14, %c0_15] : memref<16x128xf32, #tpu.memory_space<vmem>>, vector<16x128xf32>
    tpu.vector_store %arg6[%c0_14, %c0_15], %20 {strides = array<i32>} : memref<16x128xf32, #tpu.memory_space<vmem>>, vector<16x128xf32>,
    return
  }
  func.func @transform_0(%arg0: i32) -> (i32, i32) {
    %c0_i32 = arith.constant 0 : i32
    %c0_i32_0 = arith.constant 0 : i32
    return %arg0, %c0_i32 : i32, i32
  }
  func.func @transform_1(%arg0: i32) -> (i32, i32) {
    %c0_i32 = arith.constant 0 : i32
    %c0_i32_0 = arith.constant 0 : i32
    %c0_i32_1 = arith.constant 0 : i32
    return %c0_i32, %c0_i32_0 : i32, i32
  }
  func.func @transform_2(%arg0: i32) -> (i32, i32) {
    %c0_i32 = arith.constant 0 : i32
    %c0_i32_0 = arith.constant 0 : i32
    %c0_i32_1 = arith.constant 0 : i32
    return %c0_i32, %c0_i32_0 : i32, i32
  }
  func.func @transform_3(%arg0: i32) -> (i32, i32) {
    %c0_i32 = arith.constant 0 : i32
    %c0_i32_0 = arith.constant 0 : i32
    %c0_i32_1 = arith.constant 0 : i32
    return %c0_i32, %c0_i32_0 : i32, i32
  }
  func.func @transform_4(%arg0: i32) -> (i32, i32) {
    %c0_i32 = arith.constant 0 : i32
    %c0_i32_0 = arith.constant 0 : i32
    %c0_i32_1 = arith.constant 0 : i32
    return %c0_i32, %c0_i32_0 : i32, i32
  }
  func.func @transform_5(%arg0: i32) -> (i32, i32) {
    %c0_i32 = arith.constant 0 : i32
    %c0_i32_0 = arith.constant 0 : i32
    return %arg0, %c0_i32 : i32, i32
  }
}

</mosaic_0001>

<llo_original>
// kernel: tpu_custom_call.1
$region0: #{tpu_custom_call.1}
  #allocation0 [shape = 'u32[]', space=smem, size = 0x4, offset = 0x4, fixed_abs, tag = 'smem constant byte address 0x4 - core index']
  #allocation1 [shape = 'u32[144,128]{1,0:T(1,128)}', space=vmem, size = 0x12000, scoped, tag = 'internal scratch']
  %s0 = inlined_call_operand.vmem [shape: f32[16,128], index: 0, kind: input, shape index: {}]
  %s1 = inlined_call_operand.vmem [shape: f32[128,16], index: 1, kind: input, shape index: {}]
  %s2 = inlined_call_operand.vmem [shape: f32[1,16], index: 2, kind: input, shape index: {}]
  %s3 = inlined_call_operand.vmem [shape: f32[16,128], index: 3, kind: input, shape index: {}]
  %s4 = inlined_call_operand.vmem [shape: f32[1,128], index: 4, kind: input, shape index: {}]
  %s5 = inlined_call_operand.hbm [shape: f32[16,128], index: 5, kind: output, shape index: {}]
  %s6 = sld [smem:[#allocation0]]
  $region30: #{tpu_custom_call.1} parent=0
    _
  %s8 = ssub.s32 1, %s6
  %s9 = scalar_select 0, %s8, %s6
  $region1: #{tpu_custom_call.1} parent=0
    #allocation2 [shape = 'u8[8192]{0}', space=vmem, size = 0x2000, scoped, tag = 'output window, operand 0, single buffered']
    #allocation3 [shape = 's32[1]{0}', space=sflag, size = 0x4, scoped, tag = 'scoped memory for tpu_custom_call.1']
    %10 = vsyncpa [#allocation3], 0
    // Predicated region
    $region2: #{tpu_custom_call.1} parent=1 // pred_check
      _
    $region3: #{tpu_custom_call.1} parent=1 // pred_check_branch
      %12 = sbr.rel (0) target = $region5
    $region4: #{tpu_custom_call.1} parent=1 // pred_region
      _
    $region5: #{tpu_custom_call.1} parent=1 // pred_fallthru
      _
    // Predicated region
    $region6: #{tpu_custom_call.1} parent=1 // pred_check
      _
    $region7: #{tpu_custom_call.1} parent=1 // pred_check_branch
      %14 = sbr.rel (0) target = $region9
    $region8: #{tpu_custom_call.1} parent=1 // pred_region
      _
    $region9: #{tpu_custom_call.1} parent=1 // pred_fallthru
      _
    // Predicated region
    $region10: #{tpu_custom_call.1} parent=1 // pred_check
      _
    $region11: #{tpu_custom_call.1} parent=1 // pred_check_branch
      %16 = sbr.rel (0) target = $region13
    $region12: #{tpu_custom_call.1} parent=1 // pred_region
      _
    $region13: #{tpu_custom_call.1} parent=1 // pred_fallthru
      _
    // Predicated region
    $region14: #{tpu_custom_call.1} parent=1 // pred_check
      _
    $region15: #{tpu_custom_call.1} parent=1 // pred_check_branch
      %18 = sbr.rel (0) target = $region17
    $region16: #{tpu_custom_call.1} parent=1 // pred_region
      _
    $region17: #{tpu_custom_call.1} parent=1 // pred_fallthru
      _
    // Predicated region
    $region18: #{tpu_custom_call.1} parent=1 // pred_check
      _
    $region19: #{tpu_custom_call.1} parent=1 // pred_check_branch
      %20 = sbr.rel (0) target = $region21
    $region20: #{tpu_custom_call.1} parent=1 // pred_region
      _
    $region21: #{tpu_custom_call.1} parent=1 // pred_fallthru
      _
    %v21 = vld [vmem:[%s0] sm:$0xff]
    %v22 = vld [vmem:[%s0 + $0x8] sm:$0xff]
    %v23 = vld [vmem:[%s1] sm:$0xff]
    %v24 = vld [vmem:[%s1 + $0x8] sm:$0xff]
    %v25 = vld [vmem:[%s1 + $0x10] sm:$0xff]
    %v26 = vld [vmem:[%s1 + $0x18] sm:$0xff]
    %v27 = vld [vmem:[%s1 + $0x20] sm:$0xff]
    %v28 = vld [vmem:[%s1 + $0x28] sm:$0xff]
    %v29 = vld [vmem:[%s1 + $0x30] sm:$0xff]
    %v30 = vld [vmem:[%s1 + $0x38] sm:$0xff]
    %v31 = vld [vmem:[%s1 + $0x40] sm:$0xff]
    %v32 = vld [vmem:[%s1 + $0x48] sm:$0xff]
    %v33 = vld [vmem:[%s1 + $0x50] sm:$0xff]
    %v34 = vld [vmem:[%s1 + $0x58] sm:$0xff]
    %v35 = vld [vmem:[%s1 + $0x60] sm:$0xff]
    %v36 = vld [vmem:[%s1 + $0x68] sm:$0xff]
    %v37 = vld [vmem:[%s1 + $0x70] sm:$0xff]
    %v38 = vld [vmem:[%s1 + $0x78] sm:$0xff]
    %v39 = vld [vmem:[%s2] sm:$0x1]
    %v41 = vlaneseq
    %v42 = vshrl.u32 %v41, 7
    %v43 = vsub.s32 0, %v42
    %v44 = vrot.slane %v39, %v43
    %46 = vmatprep.subr.mxu0 0.0
    %47 = vmatpush1.msra.mxu0 %v38
    %48 = vmatprep.subr.mxu0 0.0
    %49 = vmatpush1.msra.mxu0 %v37
    %50 = vmatprep.subr.mxu0 0.0
    %51 = vmatpush1.msra.mxu0 %v36
    %52 = vmatprep.subr.mxu0 0.0
    %53 = vmatpush1.msra.mxu0 %v35
    %54 = vmatprep.subr.mxu0 0.0
    %55 = vmatpush1.msra.mxu0 %v34
    %56 = vmatprep.subr.mxu0 0.0
    %57 = vmatpush1.msra.mxu0 %v33
    %58 = vmatprep.subr.mxu0 0.0
    %59 = vmatpush1.msra.mxu0 %v32
    %60 = vmatprep.subr.mxu0 0.0
    %61 = vmatpush1.msra.mxu0 %v31
    %62 = vmatprep.subr.mxu0 0.0
    %63 = vmatpush1.msra.mxu0 %v30
    %64 = vmatprep.subr.mxu0 0.0
    %65 = vmatpush1.msra.mxu0 %v29
    %66 = vmatprep.subr.mxu0 0.0
    %67 = vmatpush1.msra.mxu0 %v28
    %68 = vmatprep.subr.mxu0 0.0
    %69 = vmatpush1.msra.mxu0 %v27
    %70 = vmatprep.subr.mxu0 0.0
    %71 = vmatpush1.msra.mxu0 %v26
    %72 = vmatprep.subr.mxu0 0.0
    %73 = vmatpush1.msra.mxu0 %v25
    %74 = vmatprep.subr.mxu0 0.0
    %75 = vmatpush1.msra.mxu0 %v24
    %76 = vmatprep.subr.mxu0 0.0
    %77 = vmatpush1.msra.mxu0 %v23
    %78 = vmatprep.subr.mxu0 0.0
    %79 = vmatpush2.msra.mxu0 0.0
    %80 = vmatprep.subr.mxu0 0.0
    %81 = vmatpush2.msra.mxu0 0.0
    %82 = vmatprep.subr.mxu0 0.0
    %83 = vmatpush2.msra.mxu0 0.0
    %84 = vmatprep.subr.mxu0 0.0
    %85 = vmatpush2.msra.mxu0 0.0
    %86 = vmatprep.subr.mxu0 0.0
    %87 = vmatpush2.msra.mxu0 0.0
    %88 = vmatprep.subr.mxu0 0.0
    %89 = vmatpush2.msra.mxu0 0.0
    %90 = vmatprep.subr.mxu0 0.0
    %91 = vmatpush2.msra.mxu0 0.0
    %92 = vmatprep.subr.mxu0 0.0
    %93 = vmatpush2.msra.mxu0 0.0
    %94 = vmatprep.subr.mxu0 0.0
    %95 = vmatpush2.msra.mxu0 0.0
    %96 = vmatprep.subr.mxu0 0.0
    %97 = vmatpush2.msra.mxu0 0.0
    %98 = vmatprep.subr.mxu0 0.0
    %99 = vmatpush2.msra.mxu0 0.0
    %100 = vmatprep.subr.mxu0 0.0
    %101 = vmatpush2.msra.mxu0 0.0
    %102 = vmatprep.subr.mxu0 0.0
    %103 = vmatpush2.msra.mxu0 0.0
    %104 = vmatprep.subr.mxu0 0.0
    %105 = vmatpush2.msra.mxu0 0.0
    %106 = vmatprep.subr.mxu0 0.0
    %107 = vmatpush2.msra.mxu0 0.0
    %108 = vmatprep.subr.mxu0 0.0
    %109 = vmatpush2.msra.mxu0 0.0
    %110 = vmatprep.mubr.f32.mxu0 0.0
    %111 = vmatmul.mubr.f32.gmra.mxu0 %v21
    %v112 = vpop.f32.mrf.mxu0
    %v113 = vadd.f32 %v44, %v112
    %v114 = vpop.f32.mrf.mxu0
    %115 = vmatprep.mubr.f32.mxu0 0.0
    %116 = vmatmul.mubr.f32.gmra.mxu0 %v22
    %v117 = vpop.f32.mrf.mxu0
    %v118 = vadd.f32 %v44, %v117
    %v119 = vpop.f32.mrf.mxu0
    %120 = vdwg.mxu0
    %v121 = vmax.f32 %v113, 0.0
    %v122 = vmax.f32 %v118, 0.0
    %v123 = vld [vmem:[%s3] sm:$0xff]
    %v124 = vld [vmem:[%s3 + $0x8] sm:$0xff]
    %v125 = vld [vmem:[%s4] sm:$0x1]
    %v127 = vlaneseq
    %v128 = vshrl.u32 %v127, 7
    %v129 = vsub.s32 0, %v128
    %v130 = vrot.slane %v125, %v129
    %vm132 = vcmask 130048
    %v134 = vsel %vm132, %v121, 0
    %v137 = vsel %vm132, %v122, 0
    %139 = vmatprep.subr.mxu0 0.0
    %140 = vmatpush1.msra.mxu0 0.0
    %141 = vmatprep.subr.mxu0 0.0
    %142 = vmatpush1.msra.mxu0 0.0
    %143 = vmatprep.subr.mxu0 0.0
    %144 = vmatpush1.msra.mxu0 0.0
    %145 = vmatprep.subr.mxu0 0.0
    %146 = vmatpush1.msra.mxu0 0.0
    %147 = vmatprep.subr.mxu0 0.0
    %148 = vmatpush1.msra.mxu0 0.0
    %149 = vmatprep.subr.mxu0 0.0
    %150 = vmatpush1.msra.mxu0 0.0
    %151 = vmatprep.subr.mxu0 0.0
    %152 = vmatpush1.msra.mxu0 0.0
    %153 = vmatprep.subr.mxu0 0.0
    %154 = vmatpush1.msra.mxu0 0.0
    %155 = vmatprep.subr.mxu0 0.0
    %156 = vmatpush1.msra.mxu0 0.0
    %157 = vmatprep.subr.mxu0 0.0
    %158 = vmatpush1.msra.mxu0 0.0
    %159 = vmatprep.subr.mxu0 0.0
    %160 = vmatpush1.msra.mxu0 0.0
    %161 = vmatprep.subr.mxu0 0.0
    %162 = vmatpush1.msra.mxu0 0.0
    %163 = vmatprep.subr.mxu0 0.0
    %164 = vmatpush1.msra.mxu0 0.0
    %165 = vmatprep.subr.mxu0 0.0
    %166 = vmatpush1.msra.mxu0 0.0
    %167 = vmatprep.subr.mxu0 0.0
    %168 = vmatpush1.msra.mxu0 %v124
    %169 = vmatprep.subr.mxu0 0.0
    %170 = vmatpush1.msra.mxu0 %v123
    %171 = vmatprep.subr.mxu0 0.0
    %172 = vmatpush2.msra.mxu0 0.0
    %173 = vmatprep.subr.mxu0 0.0
    %174 = vmatpush2.msra.mxu0 0.0
    %175 = vmatprep.subr.mxu0 0.0
    %176 = vmatpush2.msra.mxu0 0.0
    %177 = vmatprep.subr.mxu0 0.0
    %178 = vmatpush2.msra.mxu0 0.0
    %179 = vmatprep.subr.mxu0 0.0
    %180 = vmatpush2.msra.mxu0 0.0
    %181 = vmatprep.subr.mxu0 0.0
    %182 = vmatpush2.msra.mxu0 0.0
    %183 = vmatprep.subr.mxu0 0.0
    %184 = vmatpush2.msra.mxu0 0.0
    %185 = vmatprep.subr.mxu0 0.0
    %186 = vmatpush2.msra.mxu0 0.0
    %187 = vmatprep.subr.mxu0 0.0
    %188 = vmatpush2.msra.mxu0 0.0
    %189 = vmatprep.subr.mxu0 0.0
    %190 = vmatpush2.msra.mxu0 0.0
    %191 = vmatprep.subr.mxu0 0.0
    %192 = vmatpush2.msra.mxu0 0.0
    %193 = vmatprep.subr.mxu0 0.0
    %194 = vmatpush2.msra.mxu0 0.0
    %195 = vmatprep.subr.mxu0 0.0
    %196 = vmatpush2.msra.mxu0 0.0
    %197 = vmatprep.subr.mxu0 0.0
    %198 = vmatpush2.msra.mxu0 0.0
    %199 = vmatprep.subr.mxu0 0.0
    %200 = vmatpush2.msra.mxu0 0.0
    %201 = vmatprep.subr.mxu0 0.0
    %202 = vmatpush2.msra.mxu0 0.0
    %203 = vmatprep.mubr.f32.mxu0 0.0
    %204 = vmatmul.mubr.f32.gmra.mxu0 %v134
    %v205 = vpop.f32.mrf.mxu0
    %v206 = vadd.f32 %v130, %v205
    %v207 = vpop.f32.mrf.mxu0
    %208 = vmatprep.mubr.f32.mxu0 0.0
    %209 = vmatmul.mubr.f32.gmra.mxu0 %v137
    %v210 = vpop.f32.mrf.mxu0
    %v211 = vadd.f32 %v130, %v210
    %v212 = vpop.f32.mrf.mxu0
    %213 = vdwg.mxu0
    %v214 = vsub.f32 0.0, %v206
    %v215 = vsub.f32 0.0, %v211
    %v216 = vmul.f32 %v214, 1.442695
    %v217 = vpow.pop %v216
    %v218 = vmul.f32 %v215, 1.442695
    %v219 = vpow.pop %v218
    %v220 = vadd.f32 %v217, 1.0
    %v221 = vadd.f32 %v219, 1.0
    %v222 = vrcp.pop %v220
    %v223 = vmul.f32 1.0, %v222
    %v224 = vrcp.pop %v221
    %v225 = vmul.f32 1.0, %v224
    %v226 = vmul.f32 %v21, %v223
    %v227 = vmul.f32 %v22, %v225
    %228 = vst [vmem:[#allocation2] sm:$0xff] %v226
    %229 = vst [vmem:[#allocation2 + $0x8] sm:$0xff] %v227
    // Predicated region
    $region22: #{tpu_custom_call.1} parent=1 // pred_check
      _
    $region23: #{tpu_custom_call.1} parent=1 // pred_check_branch
      %231 = sbr.rel (0) target = $region25
    $region24: #{tpu_custom_call.1} parent=1 // pred_region
      %s233 = ssub.s32 256, 256
      %234 = vsyncadd [#allocation3], %s233
      %s235 = sshll.u32 [#allocation2], 4
      %s236 = int_to_ptr.vmem [resolvable:$true] %s235
      %241 = dma.vmem_to_hbm [thread:$0]  %s236, 256, %s5, [#allocation3], 128, 128, 8
    $region25: #{tpu_custom_call.1} parent=1 // pred_fallthru
      _
    // Predicated region
    $region26: #{tpu_custom_call.1} parent=1 // pred_check
      _
    $region27: #{tpu_custom_call.1} parent=1 // pred_check_branch
      %243 = sbr.rel (0) target = $region29
    $region28: #{tpu_custom_call.1} parent=1 // pred_region
      %244 = dma.done [#allocation3], 256
    $region29: #{tpu_custom_call.1} parent=1 // pred_fallthru
      _
    %245 = vsyncpa [#allocation3], 1

</llo_original>
